<compile_context>
chip_gen: v6e
topology: v6e:2x2x1
jax: 0.10.0
libtpu: 0.0.40
codegen_flags: <defaults>
</compile_context>

<pallas_src>
import jax
import jax.numpy as jnp
from jax import lax
from jax.experimental import pallas as pl
from jax.experimental.pallas import tpu as pltpu

INPUT_SIZE = 320
HIDDEN_SIZE1 = 18
OUTPUT_SIZE = 1
DROPOUT_RATE = 0.5  # identity at inference time

# A @ B^T on the MXU without materializing B^T (same trick as flash-attention q@k^T).
_TRANS_B_DIMS = (((1,), (1,)), ((), ()))


def _round_up(n, m):
    return ((n + m - 1) // m) * m


def mlp_kernel(x_ref, w1_ref, b1_ref, w2_ref, b2_ref, o_ref):
    # fc1 on the MXU, f32 accumulate: (tb, 320) @ (320, 18) -> (tb, 18).
    h = jnp.dot(x_ref[...], w1_ref[...], preferred_element_type=jnp.float32)
    h = jnp.maximum(h + b1_ref[...], 0.0)  # bias broadcast + ReLU (VPU)
    # Dropout (inference mode): identity.
    # fc2 as (1, 18) @ (tb, 18)^T on the MXU -> lane-dense (1, tb): batch lands on
    # lanes, so the sigmoid/cast epilogue and the output store are dense.
    y = lax.dot_general(w2_ref[...], h, _TRANS_B_DIMS,
                        preferred_element_type=jnp.float32)
    z = y + b2_ref[...]
    # sigmoid = 1/(1+exp(-z)); exp goes to the EUP (separate bundle slot).
    o_ref[...] = (1.0 / (1.0 + jnp.exp(-z))).astype(o_ref.dtype)


def simple_mlp_forward(x, w1, b1, w2, b2, *, tile_b=8192):
    """x: (B, 320) f32. w1: (320, 18), b1: (1, 18), w2: (18, 1), b2: (1, 1).
    Returns (B, 1) f32 = sigmoid(relu(x @ w1 + b1) @ w2 + b2)."""
    B = x.shape[0]
    x = x.astype(jnp.float32)

    if B <= tile_b:
        # Single tile: block == full array shape (exempt from (8,128) divisibility).
        tb = B
    else:
        # Multi-tile: multiple of 128 so x blocks are sublane-aligned and the
        # lane-dense output blocks tile the lane axis exactly.
        tb = _round_up(min(tile_b, B), 128)
    num_tiles = pl.cdiv(B, tb)
    total = num_tiles * tb

    w1f = w1.astype(jnp.float32)
    b1f = b1.reshape(1, HIDDEN_SIZE1).astype(jnp.float32)
    w2_row = w2.reshape(1, HIDDEN_SIZE1).astype(jnp.float32)  # fc2 weights as a row
    b2f = b2.reshape(1, OUTPUT_SIZE).astype(jnp.float32)

    cost = pl.CostEstimate(
        flops=2 * B * INPUT_SIZE * HIDDEN_SIZE1 + 2 * B * HIDDEN_SIZE1,
        transcendentals=B,  # one exp per row (sigmoid)
        bytes_accessed=(B * INPUT_SIZE * 4 + total * 4
                        + (INPUT_SIZE * HIDDEN_SIZE1 + 2 * HIDDEN_SIZE1 + 1) * 4),
    )

    out = pl.pallas_call(
        mlp_kernel,
        out_shape=jax.ShapeDtypeStruct((1, total), jnp.float32),
        grid=(num_tiles,),
        in_specs=[
            pl.BlockSpec((tb, INPUT_SIZE), lambda i: (i, 0)),            # x: streamed per tile
            pl.BlockSpec((INPUT_SIZE, HIDDEN_SIZE1), lambda i: (0, 0)),  # w1: VMEM-resident
            pl.BlockSpec((1, HIDDEN_SIZE1), lambda i: (0, 0)),           # b1
            pl.BlockSpec((1, HIDDEN_SIZE1), lambda i: (0, 0)),           # w2 (row)
            pl.BlockSpec((1, OUTPUT_SIZE), lambda i: (0, 0)),            # b2
        ],
        # Lane-dense output slab: batch on lanes, one (1, tb) block per grid step.
        out_specs=pl.BlockSpec((1, tb), lambda i: (0, i)),
        compiler_params=pltpu.CompilerParams(
            dimension_semantics=("parallel",),      # batch tiles independent (megacore)
            vmem_limit_bytes=48 * 1024 * 1024,      # covers tb=8192 f32 double-buffered x
        ),
        cost_estimate=cost,
    )(x, w1f, b1f, w2_row, b2f)

    # (1, num_tiles*tb) -> (B, 1); ragged-tail garbage lanes (if any) are sliced off.
    return out.reshape(total, 1)[:B]


def init_params(key):
    """Deterministic init mimicking nn.Linear's U(-1/sqrt(fan_in), 1/sqrt(fan_in))."""
    k1, k2, k3, k4 = jax.random.split(key, 4)
    bound1 = 1.0 / jnp.sqrt(INPUT_SIZE)
    bound2 = 1.0 / jnp.sqrt(HIDDEN_SIZE1)
    # stored as (in, out) so the kernel computes x @ W
    w1 = jax.random.uniform(k1, (INPUT_SIZE, HIDDEN_SIZE1), jnp.float32, -bound1, bound1)
    b1 = jax.random.uniform(k2, (1, HIDDEN_SIZE1), jnp.float32, -bound1, bound1)
    w2 = jax.random.uniform(k3, (HIDDEN_SIZE1, OUTPUT_SIZE), jnp.float32, -bound2, bound2)
    b2 = jax.random.uniform(k4, (1, OUTPUT_SIZE), jnp.float32, -bound2, bound2)
    return w1, b1, w2, b2


def reference_forward(x, w1, b1, w2, b2):
    # Plain f32 reference matching the PyTorch module (eval mode).
    h = jnp.maximum(x @ w1 + b1, 0.0)
    return 1.0 / (1.0 + jnp.exp(-(h @ w2 + b2)))


if __name__ == "__main__":
    key = jax.random.PRNGKey(0)
    kx, kx2, kx3, kp = jax.random.split(key, 4)
    w1, b1, w2, b2 = init_params(kp)

    # Small batch, single tile.
    batch = 8
    x = jax.random.normal(kx, (batch, INPUT_SIZE), jnp.float32)
    out = jax.block_until_ready(simple_mlp_forward(x, w1, b1, w2, b2))
    ref = reference_forward(x, w1, b1, w2, b2)
    assert out.shape == (batch, OUTPUT_SIZE)
    assert jnp.allclose(out, ref, atol=2e-3, rtol=2e-3)

    # Batch not a multiple of 8 (single full-array block, no padding copy).
    batch2 = 10
    x2 = jax.random.normal(kx2, (batch2, INPUT_SIZE), jnp.float32)
    out2 = jax.block_until_ready(simple_mlp_forward(x2, w1, b1, w2, b2))
    ref2 = reference_forward(x2, w1, b1, w2, b2)
    assert out2.shape == (batch2, OUTPUT_SIZE)
    assert jnp.allclose(out2, ref2, atol=2e-3, rtol=2e-3)

    # Multi-tile path with a ragged tail (grid = cdiv, no jnp.pad of x).
    batch3 = 300
    x3 = jax.random.normal(kx3, (batch3, INPUT_SIZE), jnp.float32)
    out3 = jax.block_until_ready(simple_mlp_forward(x3, w1, b1, w2, b2, tile_b=128))
    ref3 = reference_forward(x3, w1, b1, w2, b2)
    assert out3.shape == (batch3, OUTPUT_SIZE)
    assert jnp.allclose(out3, ref3, atol=2e-3, rtol=2e-3)

    print("KERNEL_OK")
</pallas_src>

<mosaic_0001>
module attributes {stable_mosaic.version = 11 : i64} {
  func.func @mlp_kernel(%arg0: i32, %arg1: memref<8x320xf32, #tpu.memory_space<vmem>>, %arg2: memref<320x18xf32, #tpu.memory_space<vmem>>, %arg3: memref<1x18xf32, #tpu.memory_space<vmem>>, %arg4: memref<1x18xf32, #tpu.memory_space<vmem>>, %arg5: memref<1x1xf32, #tpu.memory_space<vmem>>, %arg6: memref<1x8xf32, #tpu.memory_space<vmem>>) attributes {dimension_semantics = [#tpu.dimension_semantics<parallel>], iteration_bounds = array<i64: 1>, scalar_prefetch = 0 : i64, scratch_operands = 0 : i64, tpu.core_type = #tpu.core_type<tc>, window_params = [{transform_indices = @transform_0, window_bounds = array<i64: 8, 320>}, {pipeline_mode = #tpu.pipeline_mode<synchronous>, transform_indices = @transform_1, window_bounds = array<i64: 320, 18>}, {pipeline_mode = #tpu.pipeline_mode<synchronous>, transform_indices = @transform_2, window_bounds = array<i64: 1, 18>}, {pipeline_mode = #tpu.pipeline_mode<synchronous>, transform_indices = @transform_3, window_bounds = array<i64: 1, 18>}, {pipeline_mode = #tpu.pipeline_mode<synchronous>, transform_indices = @transform_4, window_bounds = array<i64: 1, 1>}, {transform_indices = @transform_5, window_bounds = array<i64: 1, 8>}]} {
    %c0 = arith.constant 0 : index
    %c0_0 = arith.constant 0 : index
    %0 = vector.load %arg1[%c0, %c0_0] : memref<8x320xf32, #tpu.memory_space<vmem>>, vector<8x320xf32>
    %c0_1 = arith.constant 0 : index
    %c0_2 = arith.constant 0 : index
    %1 = vector.load %arg2[%c0_1, %c0_2] : memref<320x18xf32, #tpu.memory_space<vmem>>, vector<320x18xf32>
    %cst = arith.constant dense<0.000000e+00> : vector<8x18xf32>
    %2 = tpu.matmul %0, %1, %cst {dimension_numbers = #tpu.dot_dimension_numbers<[1], [0], [0], [1], [0, 0, 1, 1], [], []>} : vector<8x320xf32>, vector<320x18xf32>, vector<8x18xf32> -> vector<8x18xf32>
    %c0_3 = arith.constant 0 : index
    %c0_4 = arith.constant 0 : index
    %3 = vector.load %arg3[%c0_3, %c0_4] : memref<1x18xf32, #tpu.memory_space<vmem>>, vector<1x18xf32>
    %4 = vector.broadcast %3 : vector<1x18xf32> to vector<8x18xf32>
    %5 = arith.addf %2, %4 : vector<8x18xf32>
    %cst_5 = arith.constant 0.000000e+00 : f32
    %6 = vector.broadcast %cst_5 : f32 to vector<8x18xf32>
    %7 = arith.maximumf %5, %6 : vector<8x18xf32>
    %c0_6 = arith.constant 0 : index
    %c0_7 = arith.constant 0 : index
    %8 = vector.load %arg4[%c0_6, %c0_7] : memref<1x18xf32, #tpu.memory_space<vmem>>, vector<1x18xf32>
    %cst_8 = arith.constant dense<0.000000e+00> : vector<1x8xf32>
    %9 = tpu.matmul %8, %7, %cst_8 {dimension_numbers = #tpu.dot_dimension_numbers<[1], [1], [0], [0], [0, 0, 1, 0], [], []>} : vector<1x18xf32>, vector<8x18xf32>, vector<1x8xf32> -> vector<1x8xf32>
    %c0_9 = arith.constant 0 : index
    %c0_10 = arith.constant 0 : index
    %10 = vector.load %arg5[%c0_9, %c0_10] : memref<1x1xf32, #tpu.memory_space<vmem>>, vector<1x1xf32>
    %11 = vector.broadcast %10 : vector<1x1xf32> to vector<1x8xf32>
    %12 = arith.addf %9, %11 : vector<1x8xf32>
    %cst_11 = arith.constant 0.000000e+00 : f32
    %13 = vector.broadcast %cst_11 : f32 to vector<1x8xf32>
    %14 = arith.subf %13, %12 : vector<1x8xf32>
    %15 = math.exp %14 : vector<1x8xf32>
    %cst_12 = arith.constant 1.000000e+00 : f32
    %16 = vector.broadcast %cst_12 : f32 to vector<1x8xf32>
    %17 = arith.addf %16, %15 : vector<1x8xf32>
    %cst_13 = arith.constant 1.000000e+00 : f32
    %18 = vector.broadcast %cst_13 : f32 to vector<1x8xf32>
    %19 = arith.divf %18, %17 : vector<1x8xf32>
    %c0_14 = arith.constant 0 : index
    %c0_15 = arith.constant 0 : index
    %20 = vector.load %arg6[%c0_14, %c0_15] : memref<1x8xf32, #tpu.memory_space<vmem>>, vector<1x8xf32>
    tpu.vector_store %arg6[%c0_14, %c0_15], %19 {strides = array<i32>} : memref<1x8xf32, #tpu.memory_space<vmem>>, vector<1x8xf32>,
    return
  }
  func.func @transform_0(%arg0: i32) -> (i32, i32) {
    %c0_i32 = arith.constant 0 : i32
    %c0_i32_0 = arith.constant 0 : i32
    return %arg0, %c0_i32 : i32, i32
  }
  func.func @transform_1(%arg0: i32) -> (i32, i32) {
    %c0_i32 = arith.constant 0 : i32
    %c0_i32_0 = arith.constant 0 : i32
    %c0_i32_1 = arith.constant 0 : i32
    return %c0_i32, %c0_i32_0 : i32, i32
  }
  func.func @transform_2(%arg0: i32) -> (i32, i32) {
    %c0_i32 = arith.constant 0 : i32
    %c0_i32_0 = arith.constant 0 : i32
    %c0_i32_1 = arith.constant 0 : i32
    return %c0_i32, %c0_i32_0 : i32, i32
  }
  func.func @transform_3(%arg0: i32) -> (i32, i32) {
    %c0_i32 = arith.constant 0 : i32
    %c0_i32_0 = arith.constant 0 : i32
    %c0_i32_1 = arith.constant 0 : i32
    return %c0_i32, %c0_i32_0 : i32, i32
  }
  func.func @transform_4(%arg0: i32) -> (i32, i32) {
    %c0_i32 = arith.constant 0 : i32
    %c0_i32_0 = arith.constant 0 : i32
    %c0_i32_1 = arith.constant 0 : i32
    return %c0_i32, %c0_i32_0 : i32, i32
  }
  func.func @transform_5(%arg0: i32) -> (i32, i32) {
    %c0_i32 = arith.constant 0 : i32
    %c0_i32_0 = arith.constant 0 : i32
    return %c0_i32, %arg0 : i32, i32
  }
}

</mosaic_0001>

<llo_original>
// kernel: tpu_custom_call.1
$region0: #{tpu_custom_call.1}
  #allocation0 [shape = 'u32[]', space=smem, size = 0x4, offset = 0x4, fixed_abs, tag = 'smem constant byte address 0x4 - core index']
  #allocation1 [shape = 'u32[144,128]{1,0:T(1,128)}', space=vmem, size = 0x12000, scoped, tag = 'internal scratch']
  #allocation2 [shape = 'f32[1,1]{1,0:T(1,128)S(1)}', space=vmem, size = 0x200, scoped, tag = 'scoped memory for tpu_custom_call.1']
  %s0 = inlined_call_operand.vmem [shape: f32[8,320], index: 0, kind: input, shape index: {}]
  %s1 = inlined_call_operand.vmem [shape: f32[320,18], index: 1, kind: input, shape index: {}]
  %s2 = inlined_call_operand.vmem [shape: f32[1,18], index: 2, kind: input, shape index: {}]
  %s3 = inlined_call_operand.vmem [shape: f32[1,18], index: 3, kind: input, shape index: {}]
  %s4 = inlined_call_operand.<no memory space> [shape: f32[1,1], index: 4, kind: input, shape index: {}]
  %s5 = inlined_call_operand.hbm [shape: f32[1,8], index: 5, kind: output, shape index: {}]
  %s6 = sld [smem:[#allocation0]]
  $region30: #{tpu_custom_call.1} parent=0
    _
  %s8 = ssub.s32 1, %s6
  %s9 = scalar_select 0, %s8, %s6
  %v10 = vstv %s4
  %11 = vst [vmem:[#allocation2] sm:$0x1] %v10
  $region1: #{tpu_custom_call.1} parent=0
    #allocation3 [shape = 'u8[512]{0}', space=vmem, size = 0x400, scoped, tag = 'output window, operand 0, single buffered']
    #allocation4 [shape = 's32[1]{0}', space=sflag, size = 0x4, scoped, tag = 'scoped memory for tpu_custom_call.1']
    %12 = vsyncpa [#allocation4], 0
    // Predicated region
    $region2: #{tpu_custom_call.1} parent=1 // pred_check
      _
    $region3: #{tpu_custom_call.1} parent=1 // pred_check_branch
      %14 = sbr.rel (0) target = $region5
    $region4: #{tpu_custom_call.1} parent=1 // pred_region
      _
    $region5: #{tpu_custom_call.1} parent=1 // pred_fallthru
      _
    // Predicated region
    $region6: #{tpu_custom_call.1} parent=1 // pred_check
      _
    $region7: #{tpu_custom_call.1} parent=1 // pred_check_branch
      %16 = sbr.rel (0) target = $region9
    $region8: #{tpu_custom_call.1} parent=1 // pred_region
      _
    $region9: #{tpu_custom_call.1} parent=1 // pred_fallthru
      _
    // Predicated region
    $region10: #{tpu_custom_call.1} parent=1 // pred_check
      _
    $region11: #{tpu_custom_call.1} parent=1 // pred_check_branch
      %18 = sbr.rel (0) target = $region13
    $region12: #{tpu_custom_call.1} parent=1 // pred_region
      _
    $region13: #{tpu_custom_call.1} parent=1 // pred_fallthru
      _
    // Predicated region
    $region14: #{tpu_custom_call.1} parent=1 // pred_check
      _
    $region15: #{tpu_custom_call.1} parent=1 // pred_check_branch
      %20 = sbr.rel (0) target = $region17
    $region16: #{tpu_custom_call.1} parent=1 // pred_region
      _
    $region17: #{tpu_custom_call.1} parent=1 // pred_fallthru
      _
    // Predicated region
    $region18: #{tpu_custom_call.1} parent=1 // pred_check
      _
    $region19: #{tpu_custom_call.1} parent=1 // pred_check_branch
      %22 = sbr.rel (0) target = $region21
    $region20: #{tpu_custom_call.1} parent=1 // pred_region
      _
    $region21: #{tpu_custom_call.1} parent=1 // pred_fallthru
      _
    %v23 = vld [vmem:[%s0] sm:$0xff]
    %v24 = vld [vmem:[%s0 + $0x8] sm:$0xff]
    %v25 = vld [vmem:[%s0 + $0x10] sm:$0xff]
    %v26 = vld [vmem:[%s1] sm:$0xff]
    %v27 = vld [vmem:[%s1 + $0x8] sm:$0xff]
    %v28 = vld [vmem:[%s1 + $0x10] sm:$0xff]
    %v29 = vld [vmem:[%s1 + $0x18] sm:$0xff]
    %v30 = vld [vmem:[%s1 + $0x20] sm:$0xff]
    %v31 = vld [vmem:[%s1 + $0x28] sm:$0xff]
    %v32 = vld [vmem:[%s1 + $0x30] sm:$0xff]
    %v33 = vld [vmem:[%s1 + $0x38] sm:$0xff]
    %v34 = vld [vmem:[%s1 + $0x40] sm:$0xff]
    %v35 = vld [vmem:[%s1 + $0x48] sm:$0xff]
    %v36 = vld [vmem:[%s1 + $0x50] sm:$0xff]
    %v37 = vld [vmem:[%s1 + $0x58] sm:$0xff]
    %v38 = vld [vmem:[%s1 + $0x60] sm:$0xff]
    %v39 = vld [vmem:[%s1 + $0x68] sm:$0xff]
    %v40 = vld [vmem:[%s1 + $0x70] sm:$0xff]
    %v41 = vld [vmem:[%s1 + $0x78] sm:$0xff]
    %v42 = vld [vmem:[%s1 + $0x80] sm:$0xff]
    %v43 = vld [vmem:[%s1 + $0x88] sm:$0xff]
    %v44 = vld [vmem:[%s1 + $0x90] sm:$0xff]
    %v45 = vld [vmem:[%s1 + $0x98] sm:$0xff]
    %v46 = vld [vmem:[%s1 + $0xa0] sm:$0xff]
    %v47 = vld [vmem:[%s1 + $0xa8] sm:$0xff]
    %v48 = vld [vmem:[%s1 + $0xb0] sm:$0xff]
    %v49 = vld [vmem:[%s1 + $0xb8] sm:$0xff]
    %v50 = vld [vmem:[%s1 + $0xc0] sm:$0xff]
    %v51 = vld [vmem:[%s1 + $0xc8] sm:$0xff]
    %v52 = vld [vmem:[%s1 + $0xd0] sm:$0xff]
    %v53 = vld [vmem:[%s1 + $0xd8] sm:$0xff]
    %v54 = vld [vmem:[%s1 + $0xe0] sm:$0xff]
    %v55 = vld [vmem:[%s1 + $0xe8] sm:$0xff]
    %v56 = vld [vmem:[%s1 + $0xf0] sm:$0xff]
    %v57 = vld [vmem:[%s1 + $0xf8] sm:$0xff]
    %v58 = vld [vmem:[%s1 + $0x100] sm:$0xff]
    %v59 = vld [vmem:[%s1 + $0x108] sm:$0xff]
    %v60 = vld [vmem:[%s1 + $0x110] sm:$0xff]
    %v61 = vld [vmem:[%s1 + $0x118] sm:$0xff]
    %v62 = vld [vmem:[%s1 + $0x120] sm:$0xff]
    %v63 = vld [vmem:[%s1 + $0x128] sm:$0xff]
    %v64 = vld [vmem:[%s1 + $0x130] sm:$0xff]
    %v65 = vld [vmem:[%s1 + $0x138] sm:$0xff]
    %v66 = vld [vmem:[%s2] sm:$0x1]
    %v68 = vlaneseq
    %v69 = vshrl.u32 %v68, 7
    %v70 = vsub.s32 0, %v69
    %v71 = vrot.slane %v66, %v70
    %vm73 = vcmask 523264
    %v75 = vsel %vm73, %v25, 0
    %77 = vmatprep.subr.mxu0 0.0
    %78 = vmatpush1.msra.mxu0 %v41
    %79 = vmatprep.subr.mxu0 0.0
    %80 = vmatpush1.msra.mxu0 %v40
    %81 = vmatprep.subr.mxu0 0.0
    %82 = vmatpush1.msra.mxu0 %v39
    %83 = vmatprep.subr.mxu0 0.0
    %84 = vmatpush1.msra.mxu0 %v38
    %85 = vmatprep.subr.mxu0 0.0
    %86 = vmatpush1.msra.mxu0 %v37
    %87 = vmatprep.subr.mxu0 0.0
    %88 = vmatpush1.msra.mxu0 %v36
    %89 = vmatprep.subr.mxu0 0.0
    %90 = vmatpush1.msra.mxu0 %v35
    %91 = vmatprep.subr.mxu0 0.0
    %92 = vmatpush1.msra.mxu0 %v34
    %93 = vmatprep.subr.mxu0 0.0
    %94 = vmatpush1.msra.mxu0 %v33
    %95 = vmatprep.subr.mxu0 0.0
    %96 = vmatpush1.msra.mxu0 %v32
    %97 = vmatprep.subr.mxu0 0.0
    %98 = vmatpush1.msra.mxu0 %v31
    %99 = vmatprep.subr.mxu0 0.0
    %100 = vmatpush1.msra.mxu0 %v30
    %101 = vmatprep.subr.mxu0 0.0
    %102 = vmatpush1.msra.mxu0 %v29
    %103 = vmatprep.subr.mxu0 0.0
    %104 = vmatpush1.msra.mxu0 %v28
    %105 = vmatprep.subr.mxu0 0.0
    %106 = vmatpush1.msra.mxu0 %v27
    %107 = vmatprep.subr.mxu0 0.0
    %108 = vmatpush1.msra.mxu0 %v26
    %109 = vmatprep.subr.mxu0 0.0
    %110 = vmatpush2.msra.mxu0 %v57
    %111 = vmatprep.subr.mxu0 0.0
    %112 = vmatpush2.msra.mxu0 %v56
    %113 = vmatprep.subr.mxu0 0.0
    %114 = vmatpush2.msra.mxu0 %v55
    %115 = vmatprep.subr.mxu0 0.0
    %116 = vmatpush2.msra.mxu0 %v54
    %117 = vmatprep.subr.mxu0 0.0
    %118 = vmatpush2.msra.mxu0 %v53
    %119 = vmatprep.subr.mxu0 0.0
    %120 = vmatpush2.msra.mxu0 %v52
    %121 = vmatprep.subr.mxu0 0.0
    %122 = vmatpush2.msra.mxu0 %v51
    %123 = vmatprep.subr.mxu0 0.0
    %124 = vmatpush2.msra.mxu0 %v50
    %125 = vmatprep.subr.mxu0 0.0
    %126 = vmatpush2.msra.mxu0 %v49
    %127 = vmatprep.subr.mxu0 0.0
    %128 = vmatpush2.msra.mxu0 %v48
    %129 = vmatprep.subr.mxu0 0.0
    %130 = vmatpush2.msra.mxu0 %v47
    %131 = vmatprep.subr.mxu0 0.0
    %132 = vmatpush2.msra.mxu0 %v46
    %133 = vmatprep.subr.mxu0 0.0
    %134 = vmatpush2.msra.mxu0 %v45
    %135 = vmatprep.subr.mxu0 0.0
    %136 = vmatpush2.msra.mxu0 %v44
    %137 = vmatprep.subr.mxu0 0.0
    %138 = vmatpush2.msra.mxu0 %v43
    %139 = vmatprep.subr.mxu0 0.0
    %140 = vmatpush2.msra.mxu0 %v42
    %141 = vmatprep.mubr.f32.mxu0 %v24
    %142 = vmatmul.mubr.f32.gmra.mxu0 %v23
    %v143 = vpop.f32.mrf.mxu0
    %v144 = vadd.f32 %v71, %v143
    %v145 = vpop.f32.mrf.mxu0
    %146 = vdwg.mxu0
    %147 = vmatprep.subr.mxu0 0.0
    %148 = vmatpush1.msra.mxu0 0.0
    %149 = vmatprep.subr.mxu0 0.0
    %150 = vmatpush1.msra.mxu0 0.0
    %151 = vmatprep.subr.mxu0 0.0
    %152 = vmatpush1.msra.mxu0 0.0
    %153 = vmatprep.subr.mxu0 0.0
    %154 = vmatpush1.msra.mxu0 0.0
    %155 = vmatprep.subr.mxu0 0.0
    %156 = vmatpush1.msra.mxu0 0.0
    %157 = vmatprep.subr.mxu0 0.0
    %158 = vmatpush1.msra.mxu0 0.0
    %159 = vmatprep.subr.mxu0 0.0
    %160 = vmatpush1.msra.mxu0 0.0
    %161 = vmatprep.subr.mxu0 0.0
    %162 = vmatpush1.msra.mxu0 0.0
    %163 = vmatprep.subr.mxu0 0.0
    %164 = vmatpush1.msra.mxu0 %v65
    %165 = vmatprep.subr.mxu0 0.0
    %166 = vmatpush1.msra.mxu0 %v64
    %167 = vmatprep.subr.mxu0 0.0
    %168 = vmatpush1.msra.mxu0 %v63
    %169 = vmatprep.subr.mxu0 0.0
    %170 = vmatpush1.msra.mxu0 %v62
    %171 = vmatprep.subr.mxu0 0.0
    %172 = vmatpush1.msra.mxu0 %v61
    %173 = vmatprep.subr.mxu0 0.0
    %174 = vmatpush1.msra.mxu0 %v60
    %175 = vmatprep.subr.mxu0 0.0
    %176 = vmatpush1.msra.mxu0 %v59
    %177 = vmatprep.subr.mxu0 0.0
    %178 = vmatpush1.msra.mxu0 %v58
    %179 = vmatprep.subr.mxu0 0.0
    %180 = vmatpush2.msra.mxu0 0.0
    %181 = vmatprep.subr.mxu0 0.0
    %182 = vmatpush2.msra.mxu0 0.0
    %183 = vmatprep.subr.mxu0 0.0
    %184 = vmatpush2.msra.mxu0 0.0
    %185 = vmatprep.subr.mxu0 0.0
    %186 = vmatpush2.msra.mxu0 0.0
    %187 = vmatprep.subr.mxu0 0.0
    %188 = vmatpush2.msra.mxu0 0.0
    %189 = vmatprep.subr.mxu0 0.0
    %190 = vmatpush2.msra.mxu0 0.0
    %191 = vmatprep.subr.mxu0 0.0
    %192 = vmatpush2.msra.mxu0 0.0
    %193 = vmatprep.subr.mxu0 0.0
    %194 = vmatpush2.msra.mxu0 0.0
    %195 = vmatprep.subr.mxu0 0.0
    %196 = vmatpush2.msra.mxu0 0.0
    %197 = vmatprep.subr.mxu0 0.0
    %198 = vmatpush2.msra.mxu0 0.0
    %199 = vmatprep.subr.mxu0 0.0
    %200 = vmatpush2.msra.mxu0 0.0
    %201 = vmatprep.subr.mxu0 0.0
    %202 = vmatpush2.msra.mxu0 0.0
    %203 = vmatprep.subr.mxu0 0.0
    %204 = vmatpush2.msra.mxu0 0.0
    %205 = vmatprep.subr.mxu0 0.0
    %206 = vmatpush2.msra.mxu0 0.0
    %207 = vmatprep.subr.mxu0 0.0
    %208 = vmatpush2.msra.mxu0 0.0
    %209 = vmatprep.subr.mxu0 0.0
    %210 = vmatpush2.msra.mxu0 0.0
    %211 = vmatprep.mubr.f32.mxu0 0.0
    %212 = vmatmul.mubr.f32.gmra.mxu0 %v75
    %v213 = vpop.f32.mrf.mxu0
    %v214 = vadd.f32 %v144, %v213
    %v215 = vpop.f32.mrf.mxu0
    %216 = vdwg.mxu0
    %v217 = vmax.f32 %v214, 0.0
    %v218 = vld [vmem:[%s3] sm:$0x1]
    %v219 = vld [vmem:[#allocation2] sm:$0x1]
    %221 = vset.pattern.permute.xlu0 0
    %222 = vperm.xlu0 %221, %v219
    %v223 = vpop.permute.xlu0 %222
    %v225 = vlaneseq
    %v226 = vshrl.u32 %v225, 7
    %v227 = vsub.s32 0, %v226
    %v228 = vrot.slane %v223, %v227
    %vm229 = vcmask 146432
    %v231 = vsel %vm229, %v218, 0
    %v234 = vsel %vm229, %v217, 0
    %236 = vmatprep.subr.mxu0 0.0
    %237 = vmatpush1.xpose.msra.mxu0 0.0
    %238 = vmatprep.subr.mxu0 0.0
    %239 = vmatpush1.xpose.msra.mxu0 0.0
    %240 = vmatprep.subr.mxu0 0.0
    %241 = vmatpush1.xpose.msra.mxu0 0.0
    %242 = vmatprep.subr.mxu0 0.0
    %243 = vmatpush1.xpose.msra.mxu0 0.0
    %244 = vmatprep.subr.mxu0 0.0
    %245 = vmatpush1.xpose.msra.mxu0 0.0
    %246 = vmatprep.subr.mxu0 0.0
    %247 = vmatpush1.xpose.msra.mxu0 0.0
    %248 = vmatprep.subr.mxu0 0.0
    %249 = vmatpush1.xpose.msra.mxu0 0.0
    %250 = vmatprep.subr.mxu0 0.0
    %251 = vmatpush1.xpose.msra.mxu0 0.0
    %252 = vmatprep.subr.mxu0 0.0
    %253 = vmatpush1.xpose.msra.mxu0 0.0
    %254 = vmatprep.subr.mxu0 0.0
    %255 = vmatpush1.xpose.msra.mxu0 0.0
    %256 = vmatprep.subr.mxu0 0.0
    %257 = vmatpush1.xpose.msra.mxu0 0.0
    %258 = vmatprep.subr.mxu0 0.0
    %259 = vmatpush1.xpose.msra.mxu0 0.0
    %260 = vmatprep.subr.mxu0 0.0
    %261 = vmatpush1.xpose.msra.mxu0 0.0
    %262 = vmatprep.subr.mxu0 0.0
    %263 = vmatpush1.xpose.msra.mxu0 0.0
    %264 = vmatprep.subr.mxu0 0.0
    %265 = vmatpush1.xpose.msra.mxu0 0.0
    %266 = vmatprep.subr.mxu0 0.0
    %267 = vmatpush1.xpose.msra.mxu0 %v234
    %268 = vmatprep.subr.mxu0 0.0
    %269 = vmatpush2.xpose.msra.mxu0 0.0
    %270 = vmatprep.subr.mxu0 0.0
    %271 = vmatpush2.xpose.msra.mxu0 0.0
    %272 = vmatprep.subr.mxu0 0.0
    %273 = vmatpush2.xpose.msra.mxu0 0.0
    %274 = vmatprep.subr.mxu0 0.0
    %275 = vmatpush2.xpose.msra.mxu0 0.0
    %276 = vmatprep.subr.mxu0 0.0
    %277 = vmatpush2.xpose.msra.mxu0 0.0
    %278 = vmatprep.subr.mxu0 0.0
    %279 = vmatpush2.xpose.msra.mxu0 0.0
    %280 = vmatprep.subr.mxu0 0.0
    %281 = vmatpush2.xpose.msra.mxu0 0.0
    %282 = vmatprep.subr.mxu0 0.0
    %283 = vmatpush2.xpose.msra.mxu0 0.0
    %284 = vmatprep.subr.mxu0 0.0
    %285 = vmatpush2.xpose.msra.mxu0 0.0
    %286 = vmatprep.subr.mxu0 0.0
    %287 = vmatpush2.xpose.msra.mxu0 0.0
    %288 = vmatprep.subr.mxu0 0.0
    %289 = vmatpush2.xpose.msra.mxu0 0.0
    %290 = vmatprep.subr.mxu0 0.0
    %291 = vmatpush2.xpose.msra.mxu0 0.0
    %292 = vmatprep.subr.mxu0 0.0
    %293 = vmatpush2.xpose.msra.mxu0 0.0
    %294 = vmatprep.subr.mxu0 0.0
    %295 = vmatpush2.xpose.msra.mxu0 0.0
    %296 = vmatprep.subr.mxu0 0.0
    %297 = vmatpush2.xpose.msra.mxu0 0.0
    %298 = vmatprep.subr.mxu0 0.0
    %299 = vmatpush2.xpose.msra.mxu0 0.0
    %300 = vmatprep.mubr.f32.mxu0 0.0
    %301 = vmatmul.mubr.f32.gmra.mxu0 %v231
    %v302 = vpop.f32.mrf.mxu0
    %v303 = vadd.f32 %v228, %v302
    %v304 = vpop.f32.mrf.mxu0
    %305 = vdwg.mxu0
    %v306 = vsub.f32 0.0, %v303
    %v307 = vmul.f32 %v306, 1.442695
    %v308 = vpow.pop %v307
    %v309 = vadd.f32 %v308, 1.0
    %v310 = vrcp.pop %v309
    %v311 = vmul.f32 1.0, %v310
    %vm312 = vcmask 57344
    %313 = vst.msk [vmem:[#allocation3] sm:$0x1] %vm312, %v311
    // Predicated region
    $region22: #{tpu_custom_call.1} parent=1 // pred_check
      _
    $region23: #{tpu_custom_call.1} parent=1 // pred_check_branch
      %315 = sbr.rel (0) target = $region25
    $region24: #{tpu_custom_call.1} parent=1 // pred_region
      %s317 = ssub.s32 16, 16
      %318 = vsyncadd [#allocation4], %s317
      %s320 = sshll.u32 [#allocation3], 4
      %s321 = int_to_ptr.vmem [resolvable:$true] %s320
      %323 = dma.vmem_to_hbm [thread:$0]  %s321, 16, %s5, [#allocation4]
    $region25: #{tpu_custom_call.1} parent=1 // pred_fallthru
      _
    // Predicated region
    $region26: #{tpu_custom_call.1} parent=1 // pred_check
      _
    $region27: #{tpu_custom_call.1} parent=1 // pred_check_branch
      %325 = sbr.rel (0) target = $region29
    $region28: #{tpu_custom_call.1} parent=1 // pred_region
      %326 = dma.done [#allocation4], 16
    $region29: #{tpu_custom_call.1} parent=1 // pred_fallthru
      _
    %327 = vsyncpa [#allocation4], 1

</llo_original>
